<compile_context>
chip_gen: v7x
topology: tpu7x:2x2x1
jax: 0.10.0
libtpu: 0.0.40
codegen_flags: <defaults>
</compile_context>

<pallas_src>
import jax
import jax.numpy as jnp
from jax.experimental import pallas as pl
from jax.experimental.pallas import tpu as pltpu

LANE = 128


def _decoder_block_kernel(x_ref, w_ref, gamma_ref, beta_ref, o_ref):
    # x_ref: (N, K) full extent; w_ref: (K, tn); gamma/beta: (1, tn); o_ref: (N, tn)

    # ---- Linear (bias dropped: it cancels under the batch-mean subtraction below) ----
    y = jnp.dot(x_ref[...], w_ref[...], preferred_element_type=jnp.float32)

    # ---- BatchNorm1d, training mode (batch stats, biased variance), two-pass form ----
    inv_n = jnp.float32(1.0) / jnp.float32(y.shape[0])
    mean = jnp.sum(y, axis=0, keepdims=True) * inv_n
    centered = y - mean
    var = jnp.sum(centered * centered, axis=0, keepdims=True) * inv_n
    scale = jax.lax.rsqrt(var + jnp.float32(1e-5)) * gamma_ref[...].astype(jnp.float32)
    y_bn = centered * scale + beta_ref[...].astype(jnp.float32)

    # ---- LeakyReLU(0.2) ----
    out = jnp.maximum(y_bn, 0.2 * y_bn)

    # ---- Dropout: identity (eval) ----
    o_ref[...] = out.astype(o_ref.dtype)


def _pick_tn(out_dim, requested=None):
    if requested is not None:
        return requested
    if out_dim % LANE != 0:
        # Full-extent feature block: always legal, no padding and no post-call slice
        # (masked stores on the ragged lane tail, but zero extra HBM passes).
        return out_dim
    # Prefer a lane-multiple tile dividing out_dim, capped at 512; keep >= 2 tiles when
    # possible so v7x's two TensorCores both get work on the "parallel" grid axis.
    for cand in (512, 384, 256, 128):
        if out_dim % cand == 0 and out_dim // cand >= 2:
            return cand
    for cand in (512, 384, 256, 128):
        if out_dim % cand == 0:
            return cand
    return out_dim


def decoder_block(x, w_t, b, gamma, beta, *, tn=None):
    """Fused DecoderBlock forward.

    x: (N, in_dim); w_t: (in_dim, out_dim) (transpose of nn.Linear.weight);
    b / gamma / beta: (out_dim,).

    `b` is accepted for nn.Linear API parity but unused: the BatchNorm batch-mean
    subtraction cancels a per-feature constant bias exactly.
    bf16 x / w_t are supported directly (the matmul still accumulates in f32).
    """
    del b  # cancels exactly under BatchNorm batch statistics
    N, in_dim = x.shape
    out_dim = w_t.shape[1]
    tn = _pick_tn(out_dim, tn)
    assert out_dim % tn == 0, "tn must divide out_dim (use tn=None for auto-pick)"
    n_tiles = out_dim // tn

    gamma2 = gamma.reshape(1, out_dim)
    beta2 = beta.reshape(1, out_dim)

    # Explicit VMEM budget: x block (conservatively double-buffered) + double-buffered W
    # and output tiles + gamma/beta + f32 elementwise temporaries.  Clamp to [32, 64] MiB
    # so it stays within v7x's 64 MiB while lifting the scoped default where needed.
    x_isz = x.dtype.itemsize
    w_isz = w_t.dtype.itemsize
    budget = (
        2 * N * in_dim * x_isz        # x block
        + 2 * in_dim * tn * w_isz     # streamed W tiles
        + 2 * N * tn * x_isz          # output tiles
        + 2 * 2 * tn * 4              # gamma / beta tiles
        + 4 * N * tn * 4              # f32 temporaries (y, centered, y_bn, out)
    )
    vmem_limit = int(min(max(budget + (8 << 20), 32 << 20), 64 << 20))

    return pl.pallas_call(
        _decoder_block_kernel,
        out_shape=jax.ShapeDtypeStruct((N, out_dim), x.dtype),
        grid_spec=pl.GridSpec(
            grid=(n_tiles,),
            in_specs=[
                pl.BlockSpec((N, in_dim), lambda j: (0, 0)),   # full x, fetched once
                pl.BlockSpec((in_dim, tn), lambda j: (0, j)),  # stream W feature tiles
                pl.BlockSpec((1, tn), lambda j: (0, j)),
                pl.BlockSpec((1, tn), lambda j: (0, j)),
            ],
            out_specs=pl.BlockSpec((N, tn), lambda j: (0, j)),
        ),
        # Feature tiles are fully independent (BN stats are per-feature over the batch).
        compiler_params=pltpu.CompilerParams(
            dimension_semantics=("parallel",),
            vmem_limit_bytes=vmem_limit,
        ),
    )(x, w_t, gamma2, beta2)


def reference(x, w_t, b, gamma, beta):
    y = x @ w_t + b
    eps = 1e-5
    mean = jnp.mean(y, axis=0, keepdims=True)
    var = jnp.mean((y - mean) ** 2, axis=0, keepdims=True)
    y_bn = (y - mean) / jnp.sqrt(var + eps) * gamma + beta
    return jnp.where(y_bn >= 0, y_bn, 0.2 * y_bn)


def _make_params(key, in_dim, out_dim):
    k_w, k_b, k_g, k_be = jax.random.split(key, 4)
    bound = 1.0 / jnp.sqrt(jnp.float32(in_dim))
    w_t = jax.random.uniform(k_w, (in_dim, out_dim), jnp.float32, -bound, bound)
    b = jax.random.uniform(k_b, (out_dim,), jnp.float32, -bound, bound)
    gamma = 1.0 + 0.1 * jax.random.normal(k_g, (out_dim,), dtype=jnp.float32)
    beta = 0.1 * jax.random.normal(k_be, (out_dim,), dtype=jnp.float32)
    return w_t, b, gamma, beta


if __name__ == "__main__":
    key = jax.random.PRNGKey(0)

    # Case 1: aligned-ish feature dim -> auto tn=256, 2 feature tiles (v7x megacore split),
    # un-padded non-128 contraction dim (full-extent K block).
    k1, k2, key = jax.random.split(key, 3)
    N1, in1, out1 = 64, 100, 512
    x1 = jax.random.normal(k1, (N1, in1), dtype=jnp.float32)
    w1, b1, g1, be1 = _make_params(k2, in1, out1)
    o1 = jax.block_until_ready(decoder_block(x1, w1, b1, g1, be1))
    r1 = reference(x1, w1, b1, g1, be1)  # reference keeps the bias -> proves cancellation
    assert o1.shape == (N1, out1)
    assert jnp.max(jnp.abs(o1 - r1)) < 1e-4, "mismatch vs reference (case 1)"

    # Case 2: ragged feature dim and ragged batch -> single full-extent tile, no padding.
    k3, k4, _ = jax.random.split(key, 3)
    N2, in2, out2 = 20, 96, 200
    x2 = jax.random.normal(k3, (N2, in2), dtype=jnp.float32)
    w2, b2, g2, be2 = _make_params(k4, in2, out2)
    o2 = jax.block_until_ready(decoder_block(x2, w2, b2, g2, be2))
    r2 = reference(x2, w2, b2, g2, be2)
    assert o2.shape == (N2, out2)
    assert jnp.max(jnp.abs(o2 - r2)) < 1e-4, "mismatch vs reference (case 2)"

    print("KERNEL_OK")
</pallas_src>

<mosaic_0001>
module attributes {stable_mosaic.version = 11 : i64} {
  func.func @_decoder_block_kernel(%arg0: i32, %arg1: memref<64x100xf32, #tpu.memory_space<vmem>>, %arg2: memref<100x256xf32, #tpu.memory_space<vmem>>, %arg3: memref<1x256xf32, #tpu.memory_space<vmem>>, %arg4: memref<1x256xf32, #tpu.memory_space<vmem>>, %arg5: memref<64x256xf32, #tpu.memory_space<vmem>>) attributes {dimension_semantics = [#tpu.dimension_semantics<parallel>], iteration_bounds = array<i64: 2>, scalar_prefetch = 0 : i64, scratch_operands = 0 : i64, tpu.core_type = #tpu.core_type<tc>, window_params = [{pipeline_mode = #tpu.pipeline_mode<synchronous>, transform_indices = @transform_0, window_bounds = array<i64: 64, 100>}, {transform_indices = @transform_1, window_bounds = array<i64: 100, 256>}, {transform_indices = @transform_2, window_bounds = array<i64: 1, 256>}, {transform_indices = @transform_3, window_bounds = array<i64: 1, 256>}, {transform_indices = @transform_4, window_bounds = array<i64: 64, 256>}]} {
    %c0 = arith.constant 0 : index
    %c0_0 = arith.constant 0 : index
    %0 = vector.load %arg1[%c0, %c0_0] : memref<64x100xf32, #tpu.memory_space<vmem>>, vector<64x100xf32>
    %c0_1 = arith.constant 0 : index
    %c0_2 = arith.constant 0 : index
    %1 = vector.load %arg2[%c0_1, %c0_2] : memref<100x256xf32, #tpu.memory_space<vmem>>, vector<100x256xf32>
    %cst = arith.constant dense<0.000000e+00> : vector<64x256xf32>
    %2 = tpu.matmul %0, %1, %cst {dimension_numbers = #tpu.dot_dimension_numbers<[1], [0], [0], [1], [0, 0, 1, 1], [], []>} : vector<64x100xf32>, vector<100x256xf32>, vector<64x256xf32> -> vector<64x256xf32>
    %cst_3 = arith.constant 1.000000e+00 : f32
    %cst_4 = arith.constant 6.400000e+01 : f32
    %3 = arith.divf %cst_3, %cst_4 : f32
    %cst_5 = arith.constant dense<0.000000e+00> : vector<256xf32>
    %4 = vector.multi_reduction <add>, %2, %cst_5 [0] : vector<64x256xf32> to vector<256xf32>
    %5 = vector.shape_cast %4 : vector<256xf32> to vector<1x256xf32>
    %6 = vector.broadcast %3 : f32 to vector<1x256xf32>
    %7 = arith.mulf %5, %6 : vector<1x256xf32>
    %8 = vector.broadcast %7 : vector<1x256xf32> to vector<64x256xf32>
    %9 = arith.subf %2, %8 : vector<64x256xf32>
    %10 = arith.mulf %9, %9 : vector<64x256xf32>
    %cst_6 = arith.constant dense<0.000000e+00> : vector<256xf32>
    %11 = vector.multi_reduction <add>, %10, %cst_6 [0] : vector<64x256xf32> to vector<256xf32>
    %12 = vector.shape_cast %11 : vector<256xf32> to vector<1x256xf32>
    %13 = vector.broadcast %3 : f32 to vector<1x256xf32>
    %14 = arith.mulf %12, %13 : vector<1x256xf32>
    %cst_7 = arith.constant 9.99999974E-6 : f32
    %15 = vector.broadcast %cst_7 : f32 to vector<1x256xf32>
    %16 = arith.addf %14, %15 : vector<1x256xf32>
    %17 = math.rsqrt %16 : vector<1x256xf32>
    %c0_8 = arith.constant 0 : index
    %c0_9 = arith.constant 0 : index
    %18 = vector.load %arg3[%c0_8, %c0_9] : memref<1x256xf32, #tpu.memory_space<vmem>>, vector<1x256xf32>
    %19 = arith.mulf %17, %18 : vector<1x256xf32>
    %20 = vector.broadcast %19 : vector<1x256xf32> to vector<64x256xf32>
    %21 = arith.mulf %9, %20 : vector<64x256xf32>
    %c0_10 = arith.constant 0 : index
    %c0_11 = arith.constant 0 : index
    %22 = vector.load %arg4[%c0_10, %c0_11] : memref<1x256xf32, #tpu.memory_space<vmem>>, vector<1x256xf32>
    %23 = vector.broadcast %22 : vector<1x256xf32> to vector<64x256xf32>
    %24 = arith.addf %21, %23 : vector<64x256xf32>
    %cst_12 = arith.constant 2.000000e-01 : f32
    %25 = vector.broadcast %cst_12 : f32 to vector<64x256xf32>
    %26 = arith.mulf %25, %24 : vector<64x256xf32>
    %27 = arith.maximumf %24, %26 : vector<64x256xf32>
    %c0_13 = arith.constant 0 : index
    %c0_14 = arith.constant 0 : index
    %28 = vector.load %arg5[%c0_13, %c0_14] : memref<64x256xf32, #tpu.memory_space<vmem>>, vector<64x256xf32>
    tpu.vector_store %arg5[%c0_13, %c0_14], %27 {strides = array<i32>} : memref<64x256xf32, #tpu.memory_space<vmem>>, vector<64x256xf32>,
    return
  }
  func.func @transform_0(%arg0: i32) -> (i32, i32) {
    %c0_i32 = arith.constant 0 : i32
    %c0_i32_0 = arith.constant 0 : i32
    %c0_i32_1 = arith.constant 0 : i32
    return %c0_i32, %c0_i32_0 : i32, i32
  }
  func.func @transform_1(%arg0: i32) -> (i32, i32) {
    %c0_i32 = arith.constant 0 : i32
    %c0_i32_0 = arith.constant 0 : i32
    return %c0_i32, %arg0 : i32, i32
  }
  func.func @transform_2(%arg0: i32) -> (i32, i32) {
    %c0_i32 = arith.constant 0 : i32
    %c0_i32_0 = arith.constant 0 : i32
    return %c0_i32, %arg0 : i32, i32
  }
  func.func @transform_3(%arg0: i32) -> (i32, i32) {
    %c0_i32 = arith.constant 0 : i32
    %c0_i32_0 = arith.constant 0 : i32
    return %c0_i32, %arg0 : i32, i32
  }
  func.func @transform_4(%arg0: i32) -> (i32, i32) {
    %c0_i32 = arith.constant 0 : i32
    %c0_i32_0 = arith.constant 0 : i32
    return %c0_i32, %arg0 : i32, i32
  }
}

</mosaic_0001>

<llo_original>
// kernel: tpu_custom_call.1
$region0: #{tpu_custom_call.1}
  #allocation0 [shape = 'u32[]', space=smem, size = 0x4, offset = 0x4, fixed_abs, tag = 'smem constant byte address 0x4 - core index']
  #allocation1 [shape = 'u32[144,128]{1,0:T(1,128)}', space=vmem, size = 0x12000, scoped, tag = 'internal scratch']
  %s0 = inlined_call_operand.hbm [shape: f32[64,100], index: 0, kind: input, shape index: {}]
  %s1 = inlined_call_operand.hbm [shape: f32[100,512], index: 1, kind: input, shape index: {}]
  %s2 = inlined_call_operand.vmem [shape: f32[1,512], index: 2, kind: input, shape index: {}]
  %s3 = inlined_call_operand.vmem [shape: f32[1,512], index: 3, kind: input, shape index: {}]
  %s4 = inlined_call_operand.hbm [shape: f32[64,512], index: 4, kind: output, shape index: {}]
  %s5 = sld [smem:[#allocation0]]
  $region57: #{tpu_custom_call.1} parent=0
    _
  %s7 = ssub.s32 1, %s5
  %s8 = scalar_select 0, %s7, %s5
  $region1: #{tpu_custom_call.1} parent=0
    #allocation2 [shape = 'u8[32768]{0}', space=vmem, size = 0x8000, scoped, tag = 'input window, operand 0, single buffered']
    #allocation3 [shape = 's32[2]{0}', space=sflag, size = 0x8, scoped, tag = 'scoped memory for tpu_custom_call.1']
    #allocation4 [shape = 's32[2]{0}', space=sflag, size = 0x8, scoped, tag = 'scoped memory for tpu_custom_call.1']
    #allocation5 [shape = 'u8[212992]{0}', space=vmem, size = 0x34000, scoped, tag = 'input window, operand 1']
    #allocation6 [shape = 's32[2]{0}', space=sflag, size = 0x8, scoped, tag = 'scoped memory for tpu_custom_call.1']
    #allocation7 [shape = 'u8[131072]{0}', space=vmem, size = 0x20000, scoped, tag = 'output window, operand 0']
    %9 = vsyncpa [#allocation3], 0
    %10 = vsyncpa [#allocation6], 0
    %s11 = scalar_lea.sflag [#allocation6], 1
    %12 = vsyncpa %s11, 0
    %13 = vsyncpa [#allocation4], 0
    %s14 = scalar_lea.sflag [#allocation4], 1
    %15 = vsyncpa %s14, 0
    loop: start=0, step=1, limit=4
    $region2: #{tpu_custom_call.1} parent=1 // loop_pre_header
      _
    $region3: #{tpu_custom_call.1} parent=1 // loop_header
      %s17 = sphi 0, %s21
      %p18 = scmp.ge.s32.totalorder %s17, 4
      %s25 = sphi 0, %s25
      %s27 = sphi 0, %s25
      %s28 = sphi 0, %s27
      %s42 = sphi 0, %s28
      %s48 = sphi 0, %s50
      %s51 = sphi 0, %s48
      %s52 = sphi 0, %s51
      %s68 = sphi 0, %s52
      %s74 = sphi 0, %s76
      %s77 = sphi 0, %s74
      %s78 = sphi 0, %s77
      %s94 = sphi 0, %s78
      %s100 = sphi 0, %s102
      %s103 = sphi 0, %s100
      %s104 = sphi 0, %s103
      %s120 = sphi 0, %s104
      %s126 = sphi 0, %s128
      %s129 = sphi 0, %s126
      %s130 = sphi 0, %s129
      %s146 = sphi 0, %s130
    $region4: #{tpu_custom_call.1} parent=1 // loop_header_branch
      %20 = sbr.rel (%p18) target = $region8
    $region5: #{tpu_custom_call.1} parent=1 // loop_body
      %s22 = ssub.s32 %s17, 1
      %s23 = ssub.s32 %s17, 2
      %s24 = sadd.s32 %s17, 1
      %s26 = sadd.s32 %s25, 1
      %p29 = scmp.eq.s32.totalorder %s17, 1
      %p30 = scmp.ne.s32.totalorder %s25, %s27
      %p31 = scmp.eq.s32.totalorder %s17, 0
      %p32 = por %p30, %p31
      %p33 = scmp.ne.s32.totalorder %s25, %s27
      %p34 = scmp.eq.s32.totalorder %s22, 1
      %p35 = por %p33, %p34
      %p36 = scmp.ne.s32.totalorder %s27, %s28
      %p37 = scmp.eq.s32.totalorder %s22, 0
      %p38 = por %p36, %p37
      %p39 = scmp.ne.s32.totalorder %s27, %s28
      %p40 = scmp.eq.s32.totalorder %s23, 1
      %p41 = por %p39, %p40
      %p43 = scmp.ne.s32.totalorder %s28, %s42
      %p44 = scmp.eq.s32.totalorder %s23, 0
      %p45 = por %p43, %p44
      %s46 = ssub.s32 %s17, %s24
      %p47 = scmp.eq.s32.totalorder %s46, 0
      %s49 = sadd.s32 %s48, 1
      %s50 = scalar_select %p47, %s48, %s49
      %p53 = pneg %p47
      %p54 = scmp.eq.s32.totalorder %s17, 1
      %p55 = por %p53, %p54
      %p56 = scmp.ne.s32.totalorder %s48, %s51
      %p57 = scmp.eq.s32.totalorder %s17, 0
      %p58 = por %p56, %p57
      %p59 = scmp.ne.s32.totalorder %s48, %s51
      %p60 = scmp.eq.s32.totalorder %s22, 1
      %p61 = por %p59, %p60
      %p62 = scmp.ne.s32.totalorder %s51, %s52
      %p63 = scmp.eq.s32.totalorder %s22, 0
      %p64 = por %p62, %p63
      %p65 = scmp.ne.s32.totalorder %s51, %s52
      %p66 = scmp.eq.s32.totalorder %s23, 1
      %p67 = por %p65, %p66
      %p69 = scmp.ne.s32.totalorder %s52, %s68
      %p70 = scmp.eq.s32.totalorder %s23, 0
      %p71 = por %p69, %p70
      %s72 = ssub.s32 %s17, %s24
      %p73 = scmp.eq.s32.totalorder %s72, 0
      %s75 = sadd.s32 %s74, 1
      %s76 = scalar_select %p73, %s74, %s75
      %p79 = pneg %p73
      %p80 = scmp.eq.s32.totalorder %s17, 1
      %p81 = por %p79, %p80
      %p82 = scmp.ne.s32.totalorder %s74, %s77
      %p83 = scmp.eq.s32.totalorder %s17, 0
      %p84 = por %p82, %p83
      %p85 = scmp.ne.s32.totalorder %s74, %s77
      %p86 = scmp.eq.s32.totalorder %s22, 1
      %p87 = por %p85, %p86
      %p88 = scmp.ne.s32.totalorder %s77, %s78
      %p89 = scmp.eq.s32.totalorder %s22, 0
      %p90 = por %p88, %p89
      %p91 = scmp.ne.s32.totalorder %s77, %s78
      %p92 = scmp.eq.s32.totalorder %s23, 1
      %p93 = por %p91, %p92
      %p95 = scmp.ne.s32.totalorder %s78, %s94
      %p96 = scmp.eq.s32.totalorder %s23, 0
      %p97 = por %p95, %p96
      %s98 = ssub.s32 %s17, %s24
      %p99 = scmp.eq.s32.totalorder %s98, 0
      %s101 = sadd.s32 %s100, 1
      %s102 = scalar_select %p99, %s100, %s101
      %p105 = pneg %p99
      %p106 = scmp.eq.s32.totalorder %s17, 1
      %p107 = por %p105, %p106
      %p108 = scmp.ne.s32.totalorder %s100, %s103
      %p109 = scmp.eq.s32.totalorder %s17, 0
      %p110 = por %p108, %p109
      %p111 = scmp.ne.s32.totalorder %s100, %s103
      %p112 = scmp.eq.s32.totalorder %s22, 1
      %p113 = por %p111, %p112
      %p114 = scmp.ne.s32.totalorder %s103, %s104
      %p115 = scmp.eq.s32.totalorder %s22, 0
      %p116 = por %p114, %p115
      %p117 = scmp.ne.s32.totalorder %s103, %s104
      %p118 = scmp.eq.s32.totalorder %s23, 1
      %p119 = por %p117, %p118
      %p121 = scmp.ne.s32.totalorder %s104, %s120
      %p122 = scmp.eq.s32.totalorder %s23, 0
      %p123 = por %p121, %p122
      %s124 = ssub.s32 %s17, %s24
      %p125 = scmp.eq.s32.totalorder %s124, 0
      %s127 = sadd.s32 %s126, 1
      %s128 = scalar_select %p125, %s126, %s127
      %p131 = pneg %p125
      %p132 = scmp.eq.s32.totalorder %s17, 1
      %p133 = por %p131, %p132
      %p134 = scmp.ne.s32.totalorder %s126, %s129
      %p135 = scmp.eq.s32.totalorder %s17, 0
      %p136 = por %p134, %p135
      %p137 = scmp.ne.s32.totalorder %s126, %s129
      %p138 = scmp.eq.s32.totalorder %s22, 1
      %p139 = por %p137, %p138
      %p140 = scmp.ne.s32.totalorder %s129, %s130
      %p141 = scmp.eq.s32.totalorder %s22, 0
      %p142 = por %p140, %p141
      %p143 = scmp.ne.s32.totalorder %s129, %s130
      %p144 = scmp.eq.s32.totalorder %s23, 1
      %p145 = por %p143, %p144
      %p147 = scmp.ne.s32.totalorder %s130, %s146
      %p148 = scmp.eq.s32.totalorder %s23, 0
      %p149 = por %p147, %p148
      %p150 = scmp.le.s32.totalorder 1, %s17
      %p151 = scmp.lt.s32.totalorder %s17, 3
      %p152 = pnand %p150, %p151
      %p153 = pneg %p152
      // Predicated region
      $region9: #{tpu_custom_call.1} parent=5 // pred_check
        _
      $region10: #{tpu_custom_call.1} parent=5 // pred_check_branch
        %155 = sbr.rel (%p152) target = $region12
      $region11: #{tpu_custom_call.1} parent=5 // pred_region
        %s156 = ssub.s32 %s17, 1
        // Predicated region
        $region13: #{tpu_custom_call.1} parent=11 // pred_check
          %p157 = pneg %p38
        $region14: #{tpu_custom_call.1} parent=11 // pred_check_branch
          %159 = sbr.rel (%p157) target = $region16
        $region15: #{tpu_custom_call.1} parent=11 // pred_region
          %s161 = ssub.s32 1024, 1024
          %162 = vsyncadd [#allocation3], %s161
          %s163 = sshll.u32 [#allocation2], 4
          %s164 = int_to_ptr.vmem [resolvable:$true] %s163
          %169 = dma.hbm_to_vmem [thread:$0]  %s0, 1024, %s164, [#allocation3], 128, 128, 8
        $region16: #{tpu_custom_call.1} parent=11 // pred_fallthru
          _
      $region12: #{tpu_custom_call.1} parent=5 // pred_fallthru
        _
      %p170 = scmp.lt.s32.totalorder %s17, 2
      // Predicated region
      $region17: #{tpu_custom_call.1} parent=5 // pred_check
        %p171 = pneg %p170
      $region18: #{tpu_custom_call.1} parent=5 // pred_check_branch
        %173 = sbr.rel (%p171) target = $region20
      $region19: #{tpu_custom_call.1} parent=5 // pred_region
        // Predicated region
        $region21: #{tpu_custom_call.1} parent=19 // pred_check
          %p174 = pneg %p58
        $region22: #{tpu_custom_call.1} parent=19 // pred_check_branch
          %176 = sbr.rel (%p174) target = $region24
        $region23: #{tpu_custom_call.1} parent=19 // pred_region
          %s177 = sand.u32 %s48, 1
          %s178 = scalar_lea.sflag [#allocation6], %s177
          %s179 = sand.u32 %s48, 1
          %s180 = smul.addr %s179, 208
          %s181 = scalar_lea.vmem [#allocation5], %s180
          %s182 = smul.u32 2, %s17
          %s184 = ssub.s32 3328, 3328
          %185 = vsyncadd %s178, %s184
          %s186 = smul.addr %s182, 128
          %s187 = scalar_lea.hbm %s1, %s186
          %s188 = sshll.u32 %s181, 4
          %s189 = int_to_ptr.vmem [resolvable:$true] %s188
          %194 = dma.hbm_to_vmem [thread:$0]  %s187, 3328, %s189, %s178, 512, 256, 16
        $region24: #{tpu_custom_call.1} parent=19 // pred_fallthru
          _
        // Predicated region
        $region25: #{tpu_custom_call.1} parent=19 // pred_check
          %p195 = pneg %p84
        $region26: #{tpu_custom_call.1} parent=19 // pred_check_branch
          %197 = sbr.rel (%p195) target = $region28
        $region27: #{tpu_custom_call.1} parent=19 // pred_region
          %s198 = smul.u32 2, %s17
          %p199 = scmp.lt.s32.totalorder %s198, 3
          %s200 = scalar_select %p199, %s198, 3
          %s201 = scalar_lea.vmem %s2, %s200
          %s202 = smul.u32 2, %s17
        $region28: #{tpu_custom_call.1} parent=19 // pred_fallthru
          _
        // Predicated region
        $region29: #{tpu_custom_call.1} parent=19 // pred_check
          %p203 = pneg %p110
        $region30: #{tpu_custom_call.1} parent=19 // pred_check_branch
          %205 = sbr.rel (%p203) target = $region32
        $region31: #{tpu_custom_call.1} parent=19 // pred_region
          %s206 = smul.u32 2, %s17
          %p207 = scmp.lt.s32.totalorder %s206, 3
          %s208 = scalar_select %p207, %s206, 3
          %s209 = scalar_lea.vmem %s3, %s208
          %s210 = smul.u32 2, %s17
        $region32: #{tpu_custom_call.1} parent=19 // pred_fallthru
          _
      $region20: #{tpu_custom_call.1} parent=5 // pred_fallthru
        _
      %p211 = scmp.le.s32.totalorder 1, %s17
      %p212 = scmp.lt.s32.totalorder %s17, 3
      %p213 = pnand %p211, %p212
      %p214 = pneg %p213
      // Predicated region
      $region33: #{tpu_custom_call.1} parent=5 // pred_check
        _
      $region34: #{tpu_custom_call.1} parent=5 // pred_check_branch
        %216 = sbr.rel (%p213) target = $region36
      $region35: #{tpu_custom_call.1} parent=5 // pred_region
        %s217 = ssub.s32 %s17, 1
        // Predicated region
        $region37: #{tpu_custom_call.1} parent=35 // pred_check
          %p218 = pneg %p38
        $region38: #{tpu_custom_call.1} parent=35 // pred_check_branch
          %220 = sbr.rel (%p218) target = $region40
        $region39: #{tpu_custom_call.1} parent=35 // pred_region
          %221 = dma.done [#allocation3], 1024
        $region40: #{tpu_custom_call.1} parent=35 // pred_fallthru
          _
        %s222 = sand.u32 %s51, 1
        %s223 = scalar_lea.sflag [#allocation6], %s222
        %s224 = sand.u32 %s51, 1
        %s225 = smul.addr %s224, 208
        %s226 = scalar_lea.vmem [#allocation5], %s225
        // Predicated region
        $region41: #{tpu_custom_call.1} parent=35 // pred_check
          %p227 = pneg %p64
        $region42: #{tpu_custom_call.1} parent=35 // pred_check_branch
          %229 = sbr.rel (%p227) target = $region44
        $region43: #{tpu_custom_call.1} parent=35 // pred_region
          %230 = dma.done %s223, 3328
        $region44: #{tpu_custom_call.1} parent=35 // pred_fallthru
          _
        %p231 = pneg %p38
        %p232 = pneg %p35
        %s233 = sand.u32 %s51, 1
        %s234 = scalar_lea.sflag [#allocation6], %s233
        %s235 = sand.u32 %s51, 1
        %s236 = smul.addr %s235, 208
        %s237 = scalar_lea.vmem [#allocation5], %s236
        %p238 = pneg %p64
        %p239 = pneg %p61
        %s240 = smul.u32 2, %s22
        %p241 = scmp.lt.s32.totalorder %s240, 3
        %s242 = scalar_select %p241, %s240, 3
        %s243 = scalar_lea.vmem %s2, %s242
        %p244 = pneg %p90
        %p245 = pneg %p87
        %s246 = smul.u32 2, %s22
        %p247 = scmp.lt.s32.totalorder %s246, 3
        %s248 = scalar_select %p247, %s246, 3
        %s249 = scalar_lea.vmem %s3, %s248
        %p250 = pneg %p116
        %p251 = pneg %p113
        %p252 = pneg %p142
        %p253 = pneg %p139
        %s254 = sand.u32 %s129, 1
        %s255 = scalar_lea.sflag [#allocation4], %s254
        %s256 = sand.u32 %s129, 1
        %s257 = smul.addr %s256, 128
        %s258 = scalar_lea.vmem [#allocation7], %s257
        %s259 = smul.u32 2, %s22
        %s260 = smul.u32 2, %s22
        %p261 = scmp.lt.s32.totalorder %s260, 3
        %s262 = scalar_select %p261, %s260, 3
        %s263 = scalar_lea.vmem %s2, %s262
        %s264 = smul.u32 2, %s22
        %s265 = smul.u32 2, %s22
        %p266 = scmp.lt.s32.totalorder %s265, 3
        %s267 = scalar_select %p266, %s265, 3
        %s268 = scalar_lea.vmem %s3, %s267
        %s269 = smul.u32 2, %s22
        %s270 = smul.u32 2, %s22
        %v271 = vld [vmem:[#allocation2] sm:$0xff]
        %v272 = vld [vmem:[#allocation2 + $0x8] sm:$0xff]
        %v273 = vld [vmem:[#allocation2 + $0x10] sm:$0xff]
        %v274 = vld [vmem:[#allocation2 + $0x18] sm:$0xff]
        %v275 = vld [vmem:[#allocation2 + $0x20] sm:$0xff]
        %v276 = vld [vmem:[#allocation2 + $0x28] sm:$0xff]
        %v277 = vld [vmem:[#allocation2 + $0x30] sm:$0xff]
        %v278 = vld [vmem:[#allocation2 + $0x38] sm:$0xff]
        %v279 = vld [vmem:[%s226] sm:$0xff]
        %v280 = vld [vmem:[%s226 + $0x8] sm:$0xff]
        %v281 = vld [vmem:[%s226 + $0x10] sm:$0xff]
        %v282 = vld [vmem:[%s226 + $0x18] sm:$0xff]
        %v283 = vld [vmem:[%s226 + $0x20] sm:$0xff]
        %v284 = vld [vmem:[%s226 + $0x28] sm:$0xff]
        %v285 = vld [vmem:[%s226 + $0x30] sm:$0xff]
        %v286 = vld [vmem:[%s226 + $0x38] sm:$0xff]
        %v287 = vld [vmem:[%s226 + $0x40] sm:$0xff]
        %v288 = vld [vmem:[%s226 + $0x48] sm:$0xff]
        %v289 = vld [vmem:[%s226 + $0x50] sm:$0xff]
        %v290 = vld [vmem:[%s226 + $0x58] sm:$0xff]
        %v291 = vld [vmem:[%s226 + $0x60] sm:$0xff]
        %v292 = vld [vmem:[%s226 + $0x68] sm:$0xff]
        %v293 = vld [vmem:[%s226 + $0x70] sm:$0xff]
        %v294 = vld [vmem:[%s226 + $0x78] sm:$0xff]
        %v295 = vld [vmem:[%s226 + $0x80] sm:$0xff]
        %v296 = vld [vmem:[%s226 + $0x88] sm:$0xff]
        %v297 = vld [vmem:[%s226 + $0x90] sm:$0xff]
        %v298 = vld [vmem:[%s226 + $0x98] sm:$0xff]
        %v299 = vld [vmem:[%s226 + $0xa0] sm:$0xff]
        %v300 = vld [vmem:[%s226 + $0xa8] sm:$0xff]
        %v301 = vld [vmem:[%s226 + $0xb0] sm:$0xff]
        %v302 = vld [vmem:[%s226 + $0xb8] sm:$0xff]
        %v303 = vld [vmem:[%s226 + $0xc0] sm:$0xf]
        %v304 = vld [vmem:[%s226 + $0xc8] sm:$0xf]
        %vm305 = vcmask 818176
        %v307 = vsel %vm305, %v271, 0
        %v310 = vsel %vm305, %v272, 0
        %v313 = vsel %vm305, %v273, 0
        %v316 = vsel %vm305, %v274, 0
        %v319 = vsel %vm305, %v275, 0
        %v322 = vsel %vm305, %v276, 0
        %v325 = vsel %vm305, %v277, 0
        %v328 = vsel %vm305, %v278, 0
        %vm330 = vcmask 1043456
        %v332 = vsel %vm330, %v303, 0
        %v335 = vsel %vm330, %v304, 0
        %337 = vmatprep.subr.mxu0 %v280
        %338 = vmatpush1.msra.mxu0 %v279
        %339 = vmatprep.subr.mxu0 %v282
        %340 = vmatpush1.msra.mxu0 %v281
        %341 = vmatprep.subr.mxu0 %v284
        %342 = vmatpush1.msra.mxu0 %v283
        %343 = vmatprep.subr.mxu0 %v286
        %344 = vmatpush1.msra.mxu0 %v285
        %345 = vmatprep.subr.mxu0 %v288
        %346 = vmatpush1.msra.mxu0 %v287
        %347 = vmatprep.subr.mxu0 %v290
        %348 = vmatpush1.msra.mxu0 %v289
        %349 = vmatprep.subr.mxu0 %v292
        %350 = vmatpush1.msra.mxu0 %v291
        %351 = vmatprep.subr.mxu0 %v294
        %352 = vmatpush1.msra.mxu0 %v293
        %353 = vmatprep.subr.mxu0 %v296
        %354 = vmatpush1.msra.mxu0 %v295
        %355 = vmatprep.subr.mxu0 %v298
        %356 = vmatpush1.msra.mxu0 %v297
        %357 = vmatprep.subr.mxu0 %v300
        %358 = vmatpush1.msra.mxu0 %v299
        %359 = vmatprep.subr.mxu0 %v302
        %360 = vmatpush1.msra.mxu0 %v301
        %361 = vmatprep.subr.mxu0 %v335
        %362 = vmatpush1.msra.mxu0 %v332
        %363 = vmatprep.subr.mxu0 0.0
        %364 = vmatpush1.msra.mxu0 0.0
        %365 = vmatprep.subr.mxu0 0.0
        %366 = vmatpush1.msra.mxu0 0.0
        %367 = vmatprep.subr.mxu0 0.0
        %368 = vmatpush1.msra.mxu0 0.0
        %369 = vmatprep.subr.mxu0 0.0
        %370 = vmatpush1.msra.mxu0 0.0
        %371 = vmatprep.subr.mxu0 0.0
        %372 = vmatpush1.msra.mxu0 0.0
        %373 = vmatprep.subr.mxu0 0.0
        %374 = vmatpush1.msra.mxu0 0.0
        %375 = vmatprep.subr.mxu0 0.0
        %376 = vmatpush1.msra.mxu0 0.0
        %377 = vmatprep.subr.mxu0 0.0
        %378 = vmatpush1.msra.mxu0 0.0
        %379 = vmatprep.subr.mxu0 0.0
        %380 = vmatpush1.msra.mxu0 0.0
        %381 = vmatprep.subr.mxu0 0.0
        %382 = vmatpush1.msra.mxu0 0.0
        %383 = vmatprep.subr.mxu0 0.0
        %384 = vmatpush1.msra.mxu0 0.0
        %385 = vmatprep.subr.mxu0 0.0
        %386 = vmatpush1.msra.mxu0 0.0
        %387 = vmatprep.subr.mxu0 0.0
        %388 = vmatpush1.msra.mxu0 0.0
        %389 = vmatprep.subr.mxu0 0.0
        %390 = vmatpush1.msra.mxu0 0.0
        %391 = vmatprep.subr.mxu0 0.0
        %392 = vmatpush1.msra.mxu0 0.0
        %393 = vmatprep.subr.mxu0 0.0
        %394 = vmatpush1.msra.mxu0 0.0
        %395 = vmatprep.subr.mxu0 0.0
        %396 = vmatpush1.msra.mxu0 0.0
        %397 = vmatprep.subr.mxu0 0.0
        %398 = vmatpush1.msra.mxu0 0.0
        %399 = vmatprep.subr.mxu0 0.0
        %400 = vmatpush1.msra.mxu0 0.0
        %401 = vmatprep.mubr.f32.mxu0 0.0
        %402 = vmatmul.mubr.f32.gmra.mrb[0].mxu0 %v307
        %v403 = vpop.f32.mrb[0].mxu0
        %v404 = vadd.f32 0.0, %v403
        %v405 = vpop.f32.mrb[0].mxu0
        %v406 = vadd.f32 0.0, %v405
        %407 = vmatprep.mubr.f32.mxu0 0.0
        %408 = vmatmul.mubr.f32.gmra.mrb[0].mxu0 %v310
        %v409 = vpop.f32.mrb[0].mxu0
        %v410 = vadd.f32 0.0, %v409
        %v411 = vpop.f32.mrb[0].mxu0
        %v412 = vadd.f32 0.0, %v411
        %413 = vmatprep.mubr.f32.mxu0 0.0
        %414 = vmatmul.mubr.f32.gmra.mrb[0].mxu0 %v313
        %v415 = vpop.f32.mrb[0].mxu0
        %v416 = vadd.f32 0.0, %v415
        %v417 = vpop.f32.mrb[0].mxu0
        %v418 = vadd.f32 0.0, %v417
        %419 = vmatprep.mubr.f32.mxu0 0.0
        %420 = vmatmul.mubr.f32.gmra.mrb[0].mxu0 %v316
        %v421 = vpop.f32.mrb[0].mxu0
        %v422 = vadd.f32 0.0, %v421
        %v423 = vpop.f32.mrb[0].mxu0
        %v424 = vadd.f32 0.0, %v423
        %425 = vmatprep.mubr.f32.mxu0 0.0
        %426 = vmatmul.mubr.f32.gmra.mrb[0].mxu0 %v319
        %v427 = vpop.f32.mrb[0].mxu0
        %v428 = vadd.f32 0.0, %v427
        %v429 = vpop.f32.mrb[0].mxu0
        %v430 = vadd.f32 0.0, %v429
        %431 = vmatprep.mubr.f32.mxu0 0.0
        %432 = vmatmul.mubr.f32.gmra.mrb[0].mxu0 %v322
        %v433 = vpop.f32.mrb[0].mxu0
        %v434 = vadd.f32 0.0, %v433
        %v435 = vpop.f32.mrb[0].mxu0
        %v436 = vadd.f32 0.0, %v435
        %437 = vmatprep.mubr.f32.mxu0 0.0
        %438 = vmatmul.mubr.f32.gmra.mrb[0].mxu0 %v325
        %v439 = vpop.f32.mrb[0].mxu0
        %v440 = vadd.f32 0.0, %v439
        %v441 = vpop.f32.mrb[0].mxu0
        %v442 = vadd.f32 0.0, %v441
        %443 = vmatprep.mubr.f32.mxu0 0.0
        %444 = vmatmul.mubr.f32.gmra.mrb[0].mxu0 %v328
        %v445 = vpop.f32.mrb[0].mxu0
        %v446 = vadd.f32 0.0, %v445
        %v447 = vpop.f32.mrb[0].mxu0
        %v448 = vadd.f32 0.0, %v447
        %449 = vdwg.mxu0
        %v450 = vadd.f32 %v404, %v410
        %v451 = vadd.f32 %v450, %v416
        %v452 = vadd.f32 %v451, %v422
        %v453 = vadd.f32 %v452, %v428
        %v454 = vadd.f32 %v453, %v434
        %v455 = vadd.f32 %v454, %v440
        %v456 = vadd.f32 %v455, %v446
        %v457 = vrot.slane %v456, 4
        %v458 = vadd.f32 %v456, %v457
        %v459 = vrot.slane %v458, 2
        %v460 = vadd.f32 %v458, %v459
        %v461 = vrot.slane %v460, 1
        %v462 = vadd.f32 %v460, %v461
        %v463 = vadd.f32 %v406, %v412
        %v464 = vadd.f32 %v463, %v418
        %v465 = vadd.f32 %v464, %v424
        %v466 = vadd.f32 %v465, %v430
        %v467 = vadd.f32 %v466, %v436
        %v468 = vadd.f32 %v467, %v442
        %v469 = vadd.f32 %v468, %v448
        %v470 = vrot.slane %v469, 4
        %v471 = vadd.f32 %v469, %v470
        %v472 = vrot.slane %v471, 2
        %v473 = vadd.f32 %v471, %v472
        %v474 = vrot.slane %v473, 1
        %v475 = vadd.f32 %v473, %v474
        %v476 = vmul.f32 %v462, 0.015625
        %v477 = vmul.f32 %v475, 0.015625
        %v478 = vsub.f32 %v404, %v476
        %v479 = vsub.f32 %v406, %v477
        %v480 = vsub.f32 %v410, %v476
        %v481 = vsub.f32 %v412, %v477
        %v482 = vsub.f32 %v416, %v476
        %v483 = vsub.f32 %v418, %v477
        %v484 = vsub.f32 %v422, %v476
        %v485 = vsub.f32 %v424, %v477
        %v486 = vsub.f32 %v428, %v476
        %v487 = vsub.f32 %v430, %v477
        %v488 = vsub.f32 %v434, %v476
        %v489 = vsub.f32 %v436, %v477
        %v490 = vsub.f32 %v440, %v476
        %v491 = vsub.f32 %v442, %v477
        %v492 = vsub.f32 %v446, %v476
        %v493 = vsub.f32 %v448, %v477
        %v494 = vmul.f32 %v478, %v478
        %v495 = vmul.f32 %v479, %v479
        %v496 = vmul.f32 %v480, %v480
        %v497 = vmul.f32 %v481, %v481
        %v498 = vmul.f32 %v482, %v482
        %v499 = vmul.f32 %v483, %v483
        %v500 = vmul.f32 %v484, %v484
        %v501 = vmul.f32 %v485, %v485
        %v502 = vmul.f32 %v486, %v486
        %v503 = vmul.f32 %v487, %v487
        %v504 = vmul.f32 %v488, %v488
        %v505 = vmul.f32 %v489, %v489
        %v506 = vmul.f32 %v490, %v490
        %v507 = vmul.f32 %v491, %v491
        %v508 = vmul.f32 %v492, %v492
        %v509 = vmul.f32 %v493, %v493
        %v510 = vadd.f32 %v494, %v496
        %v511 = vadd.f32 %v510, %v498
        %v512 = vadd.f32 %v511, %v500
        %v513 = vadd.f32 %v512, %v502
        %v514 = vadd.f32 %v513, %v504
        %v515 = vadd.f32 %v514, %v506
        %v516 = vadd.f32 %v515, %v508
        %v517 = vrot.slane %v516, 4
        %v518 = vadd.f32 %v516, %v517
        %v519 = vrot.slane %v518, 2
        %v520 = vadd.f32 %v518, %v519
        %v521 = vrot.slane %v520, 1
        %v522 = vadd.f32 %v520, %v521
        %v523 = vadd.f32 %v495, %v497
        %v524 = vadd.f32 %v523, %v499
        %v525 = vadd.f32 %v524, %v501
        %v526 = vadd.f32 %v525, %v503
        %v527 = vadd.f32 %v526, %v505
        %v528 = vadd.f32 %v527, %v507
        %v529 = vadd.f32 %v528, %v509
        %v530 = vrot.slane %v529, 4
        %v531 = vadd.f32 %v529, %v530
        %v532 = vrot.slane %v531, 2
        %v533 = vadd.f32 %v531, %v532
        %v534 = vrot.slane %v533, 1
        %v535 = vadd.f32 %v533, %v534
        %v536 = vmul.f32 %v522, 0.015625
        %v537 = vmul.f32 %v535, 0.015625
        %v538 = vadd.f32 %v536, 1e-05
        %v539 = vadd.f32 %v537, 1e-05
        %v540 = vrsqrt.pop %v538
        %v541 = vrsqrt.pop %v539
        %v542 = vld [vmem:[%s263] sm:$0x3]
        %v544 = vlaneseq
        %v545 = vshrl.u32 %v544, 7
        %v546 = vsub.s32 0, %v545
        %v547 = vrot.slane %v542, %v546
        %v548 = vlaneseq
        %v549 = vshrl.u32 %v548, 7
        %v550 = vsub.s32 1, %v549
        %v551 = vrot.slane %v542, %v550
        %v554 = vmul.f32 %v540, %v547
        %v555 = vmul.f32 %v541, %v551
        %v556 = vlaneseq
        %v557 = vshrl.u32 %v556, 7
        %v558 = vsub.s32 0, %v557
        %v559 = vrot.slane %v554, %v558
        %v560 = vlaneseq
        %v561 = vshrl.u32 %v560, 7
        %v562 = vsub.s32 0, %v561
        %v563 = vrot.slane %v555, %v562
        %v564 = vmul.f32 %v478, %v559
        %v565 = vmul.f32 %v479, %v563
        %v566 = vmul.f32 %v480, %v559
        %v567 = vmul.f32 %v481, %v563
        %v568 = vmul.f32 %v482, %v559
        %v569 = vmul.f32 %v483, %v563
        %v570 = vmul.f32 %v484, %v559
        %v571 = vmul.f32 %v485, %v563
        %v572 = vmul.f32 %v486, %v559
        %v573 = vmul.f32 %v487, %v563
        %v574 = vmul.f32 %v488, %v559
        %v575 = vmul.f32 %v489, %v563
        %v576 = vmul.f32 %v490, %v559
        %v577 = vmul.f32 %v491, %v563
        %v578 = vmul.f32 %v492, %v559
        %v579 = vmul.f32 %v493, %v563
        %v580 = vld [vmem:[%s268] sm:$0x3]
        %v582 = vlaneseq
        %v583 = vshrl.u32 %v582, 7
        %v584 = vsub.s32 0, %v583
        %v585 = vrot.slane %v580, %v584
        %v586 = vlaneseq
        %v587 = vshrl.u32 %v586, 7
        %v588 = vsub.s32 1, %v587
        %v589 = vrot.slane %v580, %v588
        %v592 = vadd.f32 %v564, %v585
        %v593 = vadd.f32 %v565, %v589
        %v594 = vadd.f32 %v566, %v585
        %v595 = vadd.f32 %v567, %v589
        %v596 = vadd.f32 %v568, %v585
        %v597 = vadd.f32 %v569, %v589
        %v598 = vadd.f32 %v570, %v585
        %v599 = vadd.f32 %v571, %v589
        %v600 = vadd.f32 %v572, %v585
        %v601 = vadd.f32 %v573, %v589
        %v602 = vadd.f32 %v574, %v585
        %v603 = vadd.f32 %v575, %v589
        %v604 = vadd.f32 %v576, %v585
        %v605 = vadd.f32 %v577, %v589
        %v606 = vadd.f32 %v578, %v585
        %v607 = vadd.f32 %v579, %v589
        %v608 = vmul.f32 %v592, 0.2
        %v609 = vmul.f32 %v593, 0.2
        %v610 = vmul.f32 %v594, 0.2
        %v611 = vmul.f32 %v595, 0.2
        %v612 = vmul.f32 %v596, 0.2
        %v613 = vmul.f32 %v597, 0.2
        %v614 = vmul.f32 %v598, 0.2
        %v615 = vmul.f32 %v599, 0.2
        %v616 = vmul.f32 %v600, 0.2
        %v617 = vmul.f32 %v601, 0.2
        %v618 = vmul.f32 %v602, 0.2
        %v619 = vmul.f32 %v603, 0.2
        %v620 = vmul.f32 %v604, 0.2
        %v621 = vmul.f32 %v605, 0.2
        %v622 = vmul.f32 %v606, 0.2
        %v623 = vmul.f32 %v607, 0.2
        %v624 = vmax.f32 %v592, %v608
        %v625 = vmax.f32 %v593, %v609
        %v626 = vmax.f32 %v594, %v610
        %v627 = vmax.f32 %v595, %v611
        %v628 = vmax.f32 %v596, %v612
        %v629 = vmax.f32 %v597, %v613
        %v630 = vmax.f32 %v598, %v614
        %v631 = vmax.f32 %v599, %v615
        %v632 = vmax.f32 %v600, %v616
        %v633 = vmax.f32 %v601, %v617
        %v634 = vmax.f32 %v602, %v618
        %v635 = vmax.f32 %v603, %v619
        %v636 = vmax.f32 %v604, %v620
        %v637 = vmax.f32 %v605, %v621
        %v638 = vmax.f32 %v606, %v622
        %v639 = vmax.f32 %v607, %v623
        %640 = vst [vmem:[%s258] sm:$0xff] %v624
        %641 = vst [vmem:[%s258 + $0x8] sm:$0xff] %v625
        %642 = vst [vmem:[%s258 + $0x10] sm:$0xff] %v626
        %643 = vst [vmem:[%s258 + $0x18] sm:$0xff] %v627
        %644 = vst [vmem:[%s258 + $0x20] sm:$0xff] %v628
        %645 = vst [vmem:[%s258 + $0x28] sm:$0xff] %v629
        %646 = vst [vmem:[%s258 + $0x30] sm:$0xff] %v630
        %647 = vst [vmem:[%s258 + $0x38] sm:$0xff] %v631
        %648 = vst [vmem:[%s258 + $0x40] sm:$0xff] %v632
        %649 = vst [vmem:[%s258 + $0x48] sm:$0xff] %v633
        %650 = vst [vmem:[%s258 + $0x50] sm:$0xff] %v634
        %651 = vst [vmem:[%s258 + $0x58] sm:$0xff] %v635
        %652 = vst [vmem:[%s258 + $0x60] sm:$0xff] %v636
        %653 = vst [vmem:[%s258 + $0x68] sm:$0xff] %v637
        %654 = vst [vmem:[%s258 + $0x70] sm:$0xff] %v638
        %655 = vst [vmem:[%s258 + $0x78] sm:$0xff] %v639
        %s656 = sand.u32 %s129, 1
        %s657 = scalar_lea.sflag [#allocation4], %s656
        %s658 = sand.u32 %s129, 1
        %s659 = smul.addr %s658, 128
        %s660 = scalar_lea.vmem [#allocation7], %s659
        // Predicated region
        $region45: #{tpu_custom_call.1} parent=35 // pred_check
          %p661 = pneg %p139
        $region46: #{tpu_custom_call.1} parent=35 // pred_check_branch
          %663 = sbr.rel (%p661) target = $region48
        $region47: #{tpu_custom_call.1} parent=35 // pred_region
          %s664 = smul.u32 2, %s22
          %s666 = ssub.s32 2048, 2048
          %667 = vsyncadd %s657, %s666
          %s668 = smul.addr %s664, 128
          %s669 = scalar_lea.hbm %s4, %s668
          %s670 = sshll.u32 %s660, 4
          %s671 = int_to_ptr.vmem [resolvable:$true] %s670
          %676 = dma.vmem_to_hbm [thread:$0]  %s671, 2048, %s669, %s657, 256, 512, 16
        $region48: #{tpu_custom_call.1} parent=35 // pred_fallthru
          _
      $region36: #{tpu_custom_call.1} parent=5 // pred_fallthru
        _
      %p677 = scmp.le.s32.totalorder 2, %s17
      // Predicated region
      $region49: #{tpu_custom_call.1} parent=5 // pred_check
        %p678 = pneg %p677
      $region50: #{tpu_custom_call.1} parent=5 // pred_check_branch
        %680 = sbr.rel (%p678) target = $region52
      $region51: #{tpu_custom_call.1} parent=5 // pred_region
        %s681 = ssub.s32 %s17, 2
        // Predicated region
        $region53: #{tpu_custom_call.1} parent=51 // pred_check
          %p682 = pneg %p145
        $region54: #{tpu_custom_call.1} parent=51 // pred_check_branch
          %684 = sbr.rel (%p682) target = $region56
        $region55: #{tpu_custom_call.1} parent=51 // pred_region
          %s685 = sand.u32 %s130, 1
          %s686 = scalar_lea.sflag [#allocation4], %s685
          %s687 = sand.u32 %s130, 1
          %s688 = smul.addr %s687, 128
          %s689 = scalar_lea.vmem [#allocation7], %s688
          %690 = dma.done %s686, 2048
        $region56: #{tpu_custom_call.1} parent=51 // pred_fallthru
          _
      $region52: #{tpu_custom_call.1} parent=5 // pred_fallthru
        _
    $region6: #{tpu_custom_call.1} parent=1 // loop_footer
      %s21 = sadd.s32 1, %s17
    $region7: #{tpu_custom_call.1} parent=1 // loop_footer_branch
      %16 = sbr.rel target = $region3
    $region8: #{tpu_custom_call.1} parent=1 // loop_exit
      _
    %691 = vsyncpa [#allocation3], 1
    %s692 = scalar_lea.sflag [#allocation3], 1
    %693 = vsyncpa %s692, 1
    %694 = vsyncpa [#allocation6], 1
    %s695 = scalar_lea.sflag [#allocation6], 1
    %696 = vsyncpa %s695, 1
    %697 = vsyncpa [#allocation4], 1
    %s698 = scalar_lea.sflag [#allocation4], 1
    %699 = vsyncpa %s698, 1

</llo_original>
